<compile_context>
chip_gen: v7x
topology: tpu7x:2x2x1
jax: 0.10.0
libtpu: 0.0.40
codegen_flags: <defaults>
</compile_context>

<pallas_src>
import functools

import jax
import jax.numpy as jnp
from jax.experimental import pallas as pl
from jax.experimental.pallas import tpu as pltpu


def _round_up(x, m):
    return (x + m - 1) // m * m


def _cdiv(a, b):
    return -(-a // b)


def critic_kernel(out_size, s_ref, a_ref,
                  w1s_ref, w1a_ref, b1_ref,
                  w2_ref, b2_ref,
                  w3_ref, b3_ref,
                  out_ref):
    """One batch tile of the critic MLP.

    Matmul inputs use the weights' dtype (f32 or bf16); accumulation, bias adds
    and ReLU stay in f32.
    """
    cdt = w1s_ref.dtype  # matmul-input dtype (f32 or bf16)

    # Layer 1: split matmul replaces cat([s, a], dim=1) @ W1.
    h1 = (jnp.dot(s_ref[...].astype(cdt), w1s_ref[...],
                  preferred_element_type=jnp.float32)
          + jnp.dot(a_ref[...].astype(cdt), w1a_ref[...],
                    preferred_element_type=jnp.float32)
          + b1_ref[...])
    h1 = jnp.maximum(h1, 0.0)

    # Layer 2: Linear + ReLU
    h2 = jnp.dot(h1.astype(cdt), w2_ref[...],
                 preferred_element_type=jnp.float32) + b2_ref[...]
    h2 = jnp.maximum(h2, 0.0)

    # Layer 3: Linear. w3/b3 are lane-padded (zeros) so the matmul stays
    # lane-dense in VMEM, but only the real columns are written back to HBM
    # (out_size == full last dim of the output array -> block rule satisfied).
    q = jnp.dot(h2.astype(cdt), w3_ref[...],
                preferred_element_type=jnp.float32) + b3_ref[...]
    out_ref[...] = q[:, :out_size].astype(out_ref.dtype)


def prepare_params(params, state_dim, compute_dtype=jnp.bfloat16):
    """One-time weight prep (do this OUTSIDE the training hot loop).

    - Transposes PyTorch [out, in] weights to [in, out].
    - Splits W1 into the state / action halves (eliminates in-kernel concat).
    - Pads W3 / b3 columns to a multiple of 128 (VMEM lane-dense final matmul;
      the padded columns never reach HBM).
    - Casts matmul operands to `compute_dtype` (bf16 default; pass jnp.float32
      for an exact-match path).
    """
    w1 = jnp.asarray(params["w1"]).T          # [in, hidden]
    w2 = jnp.asarray(params["w2"]).T          # [hidden, hidden]
    w3 = jnp.asarray(params["w3"]).T          # [hidden, out]
    hidden = w1.shape[1]
    out_size = w3.shape[1]
    out_padded = _round_up(out_size, 128)

    w3p = jnp.zeros((w3.shape[0], out_padded), w3.dtype).at[:, :out_size].set(w3)
    b3p = jnp.zeros((out_padded,), jnp.float32).at[:out_size].set(
        jnp.asarray(params["b3"], jnp.float32))

    return {
        "w1_s": w1[:state_dim].astype(compute_dtype),
        "w1_a": w1[state_dim:].astype(compute_dtype),
        "b1": jnp.asarray(params["b1"], jnp.float32).reshape(1, hidden),
        "w2": w2.astype(compute_dtype),
        "b2": jnp.asarray(params["b2"], jnp.float32).reshape(1, hidden),
        "w3": w3p.astype(compute_dtype),
        "b3": b3p.reshape(1, out_padded),
        "out_size": out_size,   # plain Python int
    }


def _batch_tiling(batch, block_batch):
    """Pick (tm, grid, padded_batch): tm a multiple of 8, minimal batch padding,
    and >= 2 grid steps whenever each tile can still hold >= 8 rows (v7x: both
    TensorCores get work via the 'parallel' batch axis)."""
    block_batch = max(8, _round_up(int(block_batch), 8))
    pb = _round_up(batch, 8)                 # minimal sublane padding (often 0)
    ntiles = max(1, _cdiv(pb, block_batch))
    if ntiles < 2 and pb >= 16:
        ntiles = 2
    tm = _round_up(_cdiv(pb, ntiles), 8)
    grid = _cdiv(pb, tm)
    padded = grid * tm
    return tm, grid, padded


def critic_forward(s, a, p, *, block_batch=2048):
    """Fused critic forward. `p` comes from prepare_params()."""
    batch, state_dim = s.shape
    action_dim = a.shape[1]
    hidden = p["w2"].shape[0]
    out_padded = p["w3"].shape[1]
    out_size = p["out_size"]
    cbytes = jnp.dtype(p["w2"].dtype).itemsize

    # Adaptive batch tiling: activations are (tm, features); weights stay
    # VMEM-resident (constant index_map).
    tm, num_tiles, padded_batch = _batch_tiling(batch, block_batch)
    if padded_batch != batch:
        pad = padded_batch - batch          # at most a few rows (multiple of 8)
        s = jnp.pad(s, ((0, pad), (0, 0)))
        a = jnp.pad(a, ((0, pad), (0, 0)))
    grid = (num_tiles,)

    # Rough double-buffered VMEM budget (tiles pad to (8, 128) granules).
    def tile_bytes(r, c, b):
        return _round_up(r, 8) * _round_up(c, 128) * b

    est = 2 * (tile_bytes(tm, state_dim, 4) + tile_bytes(tm, action_dim, 4)
               + tile_bytes(tm, out_size, 4))
    est += 2 * (tile_bytes(state_dim, hidden, cbytes)
                + tile_bytes(action_dim, hidden, cbytes)
                + tile_bytes(hidden, hidden, cbytes)
                + tile_bytes(hidden, out_padded, cbytes)
                + 2 * tile_bytes(1, hidden, 4) + tile_bytes(1, out_padded, 4))
    est += 2 * tile_bytes(tm, hidden, 4) + tile_bytes(tm, out_padded, 4)
    # Stay within the default scoped VMEM on all generations (v7x: 64 MiB phys).
    vmem_limit = int(min(max(3 * est, 8 << 20), 32 << 20))

    input_size = state_dim + action_dim
    flops = int(2 * padded_batch * (input_size * hidden + hidden * hidden
                                    + hidden * out_padded))
    bytes_accessed = int(
        s.size * 4 + a.size * 4
        + (p["w1_s"].size + p["w1_a"].size + p["w2"].size + p["w3"].size) * cbytes
        + (p["b1"].size + p["b2"].size + p["b3"].size) * 4
        + padded_batch * out_size * 4)      # unpadded output writeback

    tile = lambda i: (i, 0)
    full = lambda i: (0, 0)

    out = pl.pallas_call(
        functools.partial(critic_kernel, out_size),
        out_shape=jax.ShapeDtypeStruct((padded_batch, out_size), jnp.float32),
        grid=grid,
        in_specs=[
            pl.BlockSpec((tm, state_dim), tile),          # s
            pl.BlockSpec((tm, action_dim), tile),         # a
            pl.BlockSpec((state_dim, hidden), full),      # w1_s
            pl.BlockSpec((action_dim, hidden), full),     # w1_a
            pl.BlockSpec((1, hidden), full),              # b1
            pl.BlockSpec((hidden, hidden), full),         # w2
            pl.BlockSpec((1, hidden), full),              # b2
            pl.BlockSpec((hidden, out_padded), full),     # w3 (lane-padded)
            pl.BlockSpec((1, out_padded), full),          # b3 (lane-padded)
        ],
        out_specs=pl.BlockSpec((tm, out_size), tile),     # unpadded output
        compiler_params=pltpu.CompilerParams(
            dimension_semantics=("parallel",),
            vmem_limit_bytes=vmem_limit),
        cost_estimate=pl.CostEstimate(
            flops=flops, transcendentals=0, bytes_accessed=bytes_accessed),
    )(s, a, p["w1_s"], p["w1_a"], p["b1"], p["w2"], p["b2"], p["w3"], p["b3"])

    return out[:batch]


def init_params(key, input_size, hidden_size, output_size):
    """Deterministic synthetic init mimicking nn.Linear's U(-1/sqrt(fan_in), ...)."""
    ks = jax.random.split(key, 6)

    def linear_init(kw, kb, fan_in, fan_out):
        bound = 1.0 / jnp.sqrt(jnp.float32(fan_in))
        w = jax.random.uniform(kw, (fan_out, fan_in), jnp.float32, -bound, bound)
        b = jax.random.uniform(kb, (fan_out,), jnp.float32, -bound, bound)
        return w, b

    w1, b1 = linear_init(ks[0], ks[1], input_size, hidden_size)
    w2, b2 = linear_init(ks[2], ks[3], hidden_size, hidden_size)
    w3, b3 = linear_init(ks[4], ks[5], hidden_size, output_size)
    return {"w1": w1, "b1": b1, "w2": w2, "b2": b2, "w3": w3, "b3": b3}


def reference_forward(s, a, p):
    x = jnp.concatenate([s, a], axis=1)
    x = jnp.maximum(x @ p["w1"].T + p["b1"], 0.0)
    x = jnp.maximum(x @ p["w2"].T + p["b2"], 0.0)
    return x @ p["w3"].T + p["b3"]


if __name__ == "__main__":
    # Small shapes consistent with Critic(input_size, hidden, output), where
    # input_size = state_dim + action_dim because of the cat along dim 1.
    batch = 8
    state_dim = 24
    action_dim = 8
    input_size = state_dim + action_dim   # 32
    hidden_size = 32
    output_size = 1

    key = jax.random.PRNGKey(0)
    k_s, k_a, k_p = jax.random.split(key, 3)

    s = jax.random.normal(k_s, (batch, state_dim), jnp.float32)
    a = jax.random.normal(k_a, (batch, action_dim), jnp.float32)
    params = init_params(k_p, input_size, hidden_size, output_size)
    q_ref = reference_forward(s, a, params)

    # f32 path (exact vs reference).
    prepared_f32 = prepare_params(params, state_dim, compute_dtype=jnp.float32)
    q32 = jax.block_until_ready(critic_forward(s, a, prepared_f32))
    assert q32.shape == (batch, output_size)
    assert jnp.allclose(q32, q_ref, atol=1e-5, rtol=1e-5), "f32 mismatch vs reference"

    # bf16-matmul / f32-accumulate path (default; recommended on v6e / v7x).
    prepared_bf16 = prepare_params(params, state_dim)
    q16 = jax.block_until_ready(critic_forward(s, a, prepared_bf16))
    assert q16.shape == (batch, output_size)
    assert jnp.allclose(q16, q_ref, atol=5e-2, rtol=5e-2), "bf16 mismatch vs reference"

    # Exercise the multi-tile / megacore path (grid >= 2, no wrapper-side pad).
    big_batch = 512
    sb = jax.random.normal(k_s, (big_batch, state_dim), jnp.float32)
    ab = jax.random.normal(k_a, (big_batch, action_dim), jnp.float32)
    qb = jax.block_until_ready(critic_forward(sb, ab, prepared_f32, block_batch=2048))
    qb_ref = reference_forward(sb, ab, params)
    assert qb.shape == (big_batch, output_size)
    assert jnp.allclose(qb, qb_ref, atol=1e-5, rtol=1e-5), "multi-tile mismatch"

    print("KERNEL_OK")
</pallas_src>

<mosaic_0001>
module attributes {stable_mosaic.version = 11 : i64} {
  func.func @critic_kernel(%arg0: i32, %arg1: memref<8x24xf32, #tpu.memory_space<vmem>>, %arg2: memref<8x8xf32, #tpu.memory_space<vmem>>, %arg3: memref<24x32xf32, #tpu.memory_space<vmem>>, %arg4: memref<8x32xf32, #tpu.memory_space<vmem>>, %arg5: memref<1x32xf32, #tpu.memory_space<vmem>>, %arg6: memref<32x32xf32, #tpu.memory_space<vmem>>, %arg7: memref<1x32xf32, #tpu.memory_space<vmem>>, %arg8: memref<32x128xf32, #tpu.memory_space<vmem>>, %arg9: memref<1x128xf32, #tpu.memory_space<vmem>>, %arg10: memref<8x1xf32, #tpu.memory_space<vmem>>) attributes {dimension_semantics = [#tpu.dimension_semantics<parallel>], iteration_bounds = array<i64: 1>, scalar_prefetch = 0 : i64, scratch_operands = 0 : i64, tpu.core_type = #tpu.core_type<tc>, window_params = [{transform_indices = @transform_0, window_bounds = array<i64: 8, 24>}, {transform_indices = @transform_1, window_bounds = array<i64: 8, 8>}, {pipeline_mode = #tpu.pipeline_mode<synchronous>, transform_indices = @transform_2, window_bounds = array<i64: 24, 32>}, {pipeline_mode = #tpu.pipeline_mode<synchronous>, transform_indices = @transform_3, window_bounds = array<i64: 8, 32>}, {pipeline_mode = #tpu.pipeline_mode<synchronous>, transform_indices = @transform_4, window_bounds = array<i64: 1, 32>}, {pipeline_mode = #tpu.pipeline_mode<synchronous>, transform_indices = @transform_5, window_bounds = array<i64: 32, 32>}, {pipeline_mode = #tpu.pipeline_mode<synchronous>, transform_indices = @transform_6, window_bounds = array<i64: 1, 32>}, {pipeline_mode = #tpu.pipeline_mode<synchronous>, transform_indices = @transform_7, window_bounds = array<i64: 32, 128>}, {pipeline_mode = #tpu.pipeline_mode<synchronous>, transform_indices = @transform_8, window_bounds = array<i64: 1, 128>}, {transform_indices = @transform_9, window_bounds = array<i64: 8, 1>}]} {
    %c0 = arith.constant 0 : index
    %c0_0 = arith.constant 0 : index
    %0 = vector.load %arg1[%c0, %c0_0] : memref<8x24xf32, #tpu.memory_space<vmem>>, vector<8x24xf32>
    %c0_1 = arith.constant 0 : index
    %c0_2 = arith.constant 0 : index
    %1 = vector.load %arg3[%c0_1, %c0_2] : memref<24x32xf32, #tpu.memory_space<vmem>>, vector<24x32xf32>
    %cst = arith.constant dense<0.000000e+00> : vector<8x32xf32>
    %2 = tpu.matmul %0, %1, %cst {dimension_numbers = #tpu.dot_dimension_numbers<[1], [0], [0], [1], [0, 0, 1, 1], [], []>} : vector<8x24xf32>, vector<24x32xf32>, vector<8x32xf32> -> vector<8x32xf32>
    %c0_3 = arith.constant 0 : index
    %c0_4 = arith.constant 0 : index
    %3 = vector.load %arg2[%c0_3, %c0_4] : memref<8x8xf32, #tpu.memory_space<vmem>>, vector<8x8xf32>
    %c0_5 = arith.constant 0 : index
    %c0_6 = arith.constant 0 : index
    %4 = vector.load %arg4[%c0_5, %c0_6] : memref<8x32xf32, #tpu.memory_space<vmem>>, vector<8x32xf32>
    %cst_7 = arith.constant dense<0.000000e+00> : vector<8x32xf32>
    %5 = tpu.matmul %3, %4, %cst_7 {dimension_numbers = #tpu.dot_dimension_numbers<[1], [0], [0], [1], [0, 0, 1, 1], [], []>} : vector<8x8xf32>, vector<8x32xf32>, vector<8x32xf32> -> vector<8x32xf32>
    %6 = arith.addf %2, %5 : vector<8x32xf32>
    %c0_8 = arith.constant 0 : index
    %c0_9 = arith.constant 0 : index
    %7 = vector.load %arg5[%c0_8, %c0_9] : memref<1x32xf32, #tpu.memory_space<vmem>>, vector<1x32xf32>
    %8 = vector.broadcast %7 : vector<1x32xf32> to vector<8x32xf32>
    %9 = arith.addf %6, %8 : vector<8x32xf32>
    %cst_10 = arith.constant 0.000000e+00 : f32
    %10 = vector.broadcast %cst_10 : f32 to vector<8x32xf32>
    %11 = arith.maximumf %9, %10 : vector<8x32xf32>
    %c0_11 = arith.constant 0 : index
    %c0_12 = arith.constant 0 : index
    %12 = vector.load %arg6[%c0_11, %c0_12] : memref<32x32xf32, #tpu.memory_space<vmem>>, vector<32x32xf32>
    %cst_13 = arith.constant dense<0.000000e+00> : vector<8x32xf32>
    %13 = tpu.matmul %11, %12, %cst_13 {dimension_numbers = #tpu.dot_dimension_numbers<[1], [0], [0], [1], [0, 0, 1, 1], [], []>} : vector<8x32xf32>, vector<32x32xf32>, vector<8x32xf32> -> vector<8x32xf32>
    %c0_14 = arith.constant 0 : index
    %c0_15 = arith.constant 0 : index
    %14 = vector.load %arg7[%c0_14, %c0_15] : memref<1x32xf32, #tpu.memory_space<vmem>>, vector<1x32xf32>
    %15 = vector.broadcast %14 : vector<1x32xf32> to vector<8x32xf32>
    %16 = arith.addf %13, %15 : vector<8x32xf32>
    %cst_16 = arith.constant 0.000000e+00 : f32
    %17 = vector.broadcast %cst_16 : f32 to vector<8x32xf32>
    %18 = arith.maximumf %16, %17 : vector<8x32xf32>
    %c0_17 = arith.constant 0 : index
    %c0_18 = arith.constant 0 : index
    %19 = vector.load %arg8[%c0_17, %c0_18] : memref<32x128xf32, #tpu.memory_space<vmem>>, vector<32x128xf32>
    %cst_19 = arith.constant dense<0.000000e+00> : vector<8x128xf32>
    %20 = tpu.matmul %18, %19, %cst_19 {dimension_numbers = #tpu.dot_dimension_numbers<[1], [0], [0], [1], [0, 0, 1, 1], [], []>} : vector<8x32xf32>, vector<32x128xf32>, vector<8x128xf32> -> vector<8x128xf32>
    %c0_20 = arith.constant 0 : index
    %c0_21 = arith.constant 0 : index
    %21 = vector.load %arg9[%c0_20, %c0_21] : memref<1x128xf32, #tpu.memory_space<vmem>>, vector<1x128xf32>
    %22 = vector.broadcast %21 : vector<1x128xf32> to vector<8x128xf32>
    %23 = arith.addf %20, %22 : vector<8x128xf32>
    %24 = vector.extract_strided_slice %23 {offsets = [0, 0], sizes = [8, 1], strides = [1, 1]} : vector<8x128xf32> to vector<8x1xf32>
    %c0_22 = arith.constant 0 : index
    %c0_23 = arith.constant 0 : index
    %25 = vector.load %arg10[%c0_22, %c0_23] : memref<8x1xf32, #tpu.memory_space<vmem>>, vector<8x1xf32>
    tpu.vector_store %arg10[%c0_22, %c0_23], %24 {strides = array<i32>} : memref<8x1xf32, #tpu.memory_space<vmem>>, vector<8x1xf32>,
    return
  }
  func.func @transform_0(%arg0: i32) -> (i32, i32) {
    %c0_i32 = arith.constant 0 : i32
    %c0_i32_0 = arith.constant 0 : i32
    return %arg0, %c0_i32 : i32, i32
  }
  func.func @transform_1(%arg0: i32) -> (i32, i32) {
    %c0_i32 = arith.constant 0 : i32
    %c0_i32_0 = arith.constant 0 : i32
    return %arg0, %c0_i32 : i32, i32
  }
  func.func @transform_2(%arg0: i32) -> (i32, i32) {
    %c0_i32 = arith.constant 0 : i32
    %c0_i32_0 = arith.constant 0 : i32
    %c0_i32_1 = arith.constant 0 : i32
    return %c0_i32, %c0_i32_0 : i32, i32
  }
  func.func @transform_3(%arg0: i32) -> (i32, i32) {
    %c0_i32 = arith.constant 0 : i32
    %c0_i32_0 = arith.constant 0 : i32
    %c0_i32_1 = arith.constant 0 : i32
    return %c0_i32, %c0_i32_0 : i32, i32
  }
  func.func @transform_4(%arg0: i32) -> (i32, i32) {
    %c0_i32 = arith.constant 0 : i32
    %c0_i32_0 = arith.constant 0 : i32
    %c0_i32_1 = arith.constant 0 : i32
    return %c0_i32, %c0_i32_0 : i32, i32
  }
  func.func @transform_5(%arg0: i32) -> (i32, i32) {
    %c0_i32 = arith.constant 0 : i32
    %c0_i32_0 = arith.constant 0 : i32
    %c0_i32_1 = arith.constant 0 : i32
    return %c0_i32, %c0_i32_0 : i32, i32
  }
  func.func @transform_6(%arg0: i32) -> (i32, i32) {
    %c0_i32 = arith.constant 0 : i32
    %c0_i32_0 = arith.constant 0 : i32
    %c0_i32_1 = arith.constant 0 : i32
    return %c0_i32, %c0_i32_0 : i32, i32
  }
  func.func @transform_7(%arg0: i32) -> (i32, i32) {
    %c0_i32 = arith.constant 0 : i32
    %c0_i32_0 = arith.constant 0 : i32
    %c0_i32_1 = arith.constant 0 : i32
    return %c0_i32, %c0_i32_0 : i32, i32
  }
  func.func @transform_8(%arg0: i32) -> (i32, i32) {
    %c0_i32 = arith.constant 0 : i32
    %c0_i32_0 = arith.constant 0 : i32
    %c0_i32_1 = arith.constant 0 : i32
    return %c0_i32, %c0_i32_0 : i32, i32
  }
  func.func @transform_9(%arg0: i32) -> (i32, i32) {
    %c0_i32 = arith.constant 0 : i32
    %c0_i32_0 = arith.constant 0 : i32
    return %arg0, %c0_i32 : i32, i32
  }
}

</mosaic_0001>

<llo_original>
// kernel: tpu_custom_call.1
$region0: #{tpu_custom_call.1}
  #allocation0 [shape = 'u32[]', space=smem, size = 0x4, offset = 0x4, fixed_abs, tag = 'smem constant byte address 0x4 - core index']
  #allocation1 [shape = 'u32[144,128]{1,0:T(1,128)}', space=vmem, size = 0x12000, scoped, tag = 'internal scratch']
  %s0 = inlined_call_operand.hbm [shape: f32[8,24], index: 0, kind: input, shape index: {}]
  %s1 = inlined_call_operand.hbm [shape: f32[8,8], index: 1, kind: input, shape index: {}]
  %s2 = inlined_call_operand.hbm [shape: f32[24,32], index: 2, kind: input, shape index: {}]
  %s3 = inlined_call_operand.vmem [shape: f32[8,32], index: 3, kind: input, shape index: {}]
  %s4 = inlined_call_operand.vmem [shape: f32[1,32], index: 4, kind: input, shape index: {}]
  %s5 = inlined_call_operand.hbm [shape: f32[32,32], index: 5, kind: input, shape index: {}]
  %s6 = inlined_call_operand.vmem [shape: f32[1,32], index: 6, kind: input, shape index: {}]
  %s7 = inlined_call_operand.hbm [shape: f32[32,128], index: 7, kind: input, shape index: {}]
  %s8 = inlined_call_operand.vmem [shape: f32[1,128], index: 8, kind: input, shape index: {}]
  %s9 = inlined_call_operand.vmem [shape: f32[8,1], index: 9, kind: output, shape index: {}]
  %s10 = sld [smem:[#allocation0]]
  $region66: #{tpu_custom_call.1} parent=0
    _
  %s12 = ssub.s32 1, %s10
  %s13 = scalar_select 0, %s12, %s10
  $region1: #{tpu_custom_call.1} parent=0
    #allocation2 [shape = 'u8[4096]{0}', space=vmem, size = 0x1000, scoped, tag = 'input window, operand 0, single buffered']
    #allocation3 [shape = 's32[1]{0}', space=sflag, size = 0x4, scoped, tag = 'scoped memory for tpu_custom_call.1']
    #allocation4 [shape = 'u8[4096]{0}', space=vmem, size = 0x1000, scoped, tag = 'input window, operand 1, single buffered']
    #allocation5 [shape = 's32[1]{0}', space=sflag, size = 0x4, scoped, tag = 'scoped memory for tpu_custom_call.1']
    #allocation6 [shape = 'u8[12288]{0}', space=vmem, size = 0x3000, scoped, tag = 'input window, operand 2, single buffered']
    #allocation7 [shape = 'u8[16384]{0}', space=vmem, size = 0x4000, scoped, tag = 'input window, operand 5, single buffered']
    #allocation8 [shape = 's32[1]{0}', space=sflag, size = 0x4, scoped, tag = 'scoped memory for tpu_custom_call.1']
    #allocation9 [shape = 'u8[16384]{0}', space=vmem, size = 0x4000, scoped, tag = 'input window, operand 7, single buffered']
    %14 = vsyncpa [#allocation3], 0
    %15 = vsyncpa [#allocation5], 0
    %16 = vsyncpa [#allocation8], 0
    // Predicated region
    $region2: #{tpu_custom_call.1} parent=1 // pred_check
      _
    $region3: #{tpu_custom_call.1} parent=1 // pred_check_branch
      %18 = sbr.rel (0) target = $region5
    $region4: #{tpu_custom_call.1} parent=1 // pred_region
      %s20 = ssub.s32 128, 128
      %21 = vsyncadd [#allocation3], %s20
      %s23 = sshll.u32 [#allocation2], 4
      %s24 = int_to_ptr.vmem [resolvable:$true] %s23
      %26 = dma.hbm_to_vmem [thread:$0]  %s0, 128, %s24, [#allocation3]
    $region5: #{tpu_custom_call.1} parent=1 // pred_fallthru
      _
    // Predicated region
    $region6: #{tpu_custom_call.1} parent=1 // pred_check
      _
    $region7: #{tpu_custom_call.1} parent=1 // pred_check_branch
      %28 = sbr.rel (0) target = $region9
    $region8: #{tpu_custom_call.1} parent=1 // pred_region
      %s30 = ssub.s32 128, 128
      %31 = vsyncadd [#allocation5], %s30
      %s33 = sshll.u32 [#allocation4], 4
      %s34 = int_to_ptr.vmem [resolvable:$true] %s33
      %36 = dma.hbm_to_vmem [thread:$0]  %s1, 128, %s34, [#allocation5]
    $region9: #{tpu_custom_call.1} parent=1 // pred_fallthru
      _
    // Predicated region
    $region10: #{tpu_custom_call.1} parent=1 // pred_check
      _
    $region11: #{tpu_custom_call.1} parent=1 // pred_check_branch
      %38 = sbr.rel (0) target = $region13
    $region12: #{tpu_custom_call.1} parent=1 // pred_region
      %s40 = ssub.s32 384, 384
      %41 = vsyncadd [#allocation5], %s40
      %s42 = sshll.u32 [#allocation6], 4
      %s43 = int_to_ptr.vmem [resolvable:$true] %s42
      %48 = dma.hbm_to_vmem [thread:$0]  %s2, 384, %s43, [#allocation5], 128, 128, 8
    $region13: #{tpu_custom_call.1} parent=1 // pred_fallthru
      _
    // Predicated region
    $region14: #{tpu_custom_call.1} parent=1 // pred_check
      _
    $region15: #{tpu_custom_call.1} parent=1 // pred_check_branch
      %50 = sbr.rel (0) target = $region17
    $region16: #{tpu_custom_call.1} parent=1 // pred_region
      _
    $region17: #{tpu_custom_call.1} parent=1 // pred_fallthru
      _
    // Predicated region
    $region18: #{tpu_custom_call.1} parent=1 // pred_check
      _
    $region19: #{tpu_custom_call.1} parent=1 // pred_check_branch
      %52 = sbr.rel (0) target = $region21
    $region20: #{tpu_custom_call.1} parent=1 // pred_region
      _
    $region21: #{tpu_custom_call.1} parent=1 // pred_fallthru
      _
    // Predicated region
    $region22: #{tpu_custom_call.1} parent=1 // pred_check
      _
    $region23: #{tpu_custom_call.1} parent=1 // pred_check_branch
      %54 = sbr.rel (0) target = $region25
    $region24: #{tpu_custom_call.1} parent=1 // pred_region
      %s56 = ssub.s32 512, 512
      %57 = vsyncadd [#allocation8], %s56
      %s58 = sshll.u32 [#allocation7], 4
      %s59 = int_to_ptr.vmem [resolvable:$true] %s58
      %64 = dma.hbm_to_vmem [thread:$0]  %s5, 512, %s59, [#allocation8], 128, 128, 8
    $region25: #{tpu_custom_call.1} parent=1 // pred_fallthru
      _
    // Predicated region
    $region26: #{tpu_custom_call.1} parent=1 // pred_check
      _
    $region27: #{tpu_custom_call.1} parent=1 // pred_check_branch
      %66 = sbr.rel (0) target = $region29
    $region28: #{tpu_custom_call.1} parent=1 // pred_region
      _
    $region29: #{tpu_custom_call.1} parent=1 // pred_fallthru
      _
    // Predicated region
    $region30: #{tpu_custom_call.1} parent=1 // pred_check
      _
    $region31: #{tpu_custom_call.1} parent=1 // pred_check_branch
      %68 = sbr.rel (0) target = $region33
    $region32: #{tpu_custom_call.1} parent=1 // pred_region
      %s70 = ssub.s32 512, 512
      %71 = vsyncadd [#allocation8], %s70
      %s72 = sshll.u32 [#allocation9], 4
      %s73 = int_to_ptr.vmem [resolvable:$true] %s72
      %78 = dma.hbm_to_vmem [thread:$0]  %s7, 512, %s73, [#allocation8], 128, 128, 8
    $region33: #{tpu_custom_call.1} parent=1 // pred_fallthru
      _
    // Predicated region
    $region34: #{tpu_custom_call.1} parent=1 // pred_check
      _
    $region35: #{tpu_custom_call.1} parent=1 // pred_check_branch
      %80 = sbr.rel (0) target = $region37
    $region36: #{tpu_custom_call.1} parent=1 // pred_region
      _
    $region37: #{tpu_custom_call.1} parent=1 // pred_fallthru
      _
    // Predicated region
    $region38: #{tpu_custom_call.1} parent=1 // pred_check
      _
    $region39: #{tpu_custom_call.1} parent=1 // pred_check_branch
      %82 = sbr.rel (0) target = $region41
    $region40: #{tpu_custom_call.1} parent=1 // pred_region
      %83 = dma.done [#allocation3], 128
    $region41: #{tpu_custom_call.1} parent=1 // pred_fallthru
      _
    // Predicated region
    $region42: #{tpu_custom_call.1} parent=1 // pred_check
      _
    $region43: #{tpu_custom_call.1} parent=1 // pred_check_branch
      %85 = sbr.rel (0) target = $region45
    $region44: #{tpu_custom_call.1} parent=1 // pred_region
      %86 = dma.done [#allocation5], 128
    $region45: #{tpu_custom_call.1} parent=1 // pred_fallthru
      _
    // Predicated region
    $region46: #{tpu_custom_call.1} parent=1 // pred_check
      _
    $region47: #{tpu_custom_call.1} parent=1 // pred_check_branch
      %88 = sbr.rel (0) target = $region49
    $region48: #{tpu_custom_call.1} parent=1 // pred_region
      %89 = dma.done [#allocation5], 384
    $region49: #{tpu_custom_call.1} parent=1 // pred_fallthru
      _
    // Predicated region
    $region50: #{tpu_custom_call.1} parent=1 // pred_check
      _
    $region51: #{tpu_custom_call.1} parent=1 // pred_check_branch
      %91 = sbr.rel (0) target = $region53
    $region52: #{tpu_custom_call.1} parent=1 // pred_region
      %92 = dma.done [#allocation8], 512
    $region53: #{tpu_custom_call.1} parent=1 // pred_fallthru
      _
    // Predicated region
    $region54: #{tpu_custom_call.1} parent=1 // pred_check
      _
    $region55: #{tpu_custom_call.1} parent=1 // pred_check_branch
      %94 = sbr.rel (0) target = $region57
    $region56: #{tpu_custom_call.1} parent=1 // pred_region
      %95 = dma.done [#allocation8], 512
    $region57: #{tpu_custom_call.1} parent=1 // pred_fallthru
      _
    %v96 = vld [vmem:[#allocation2] sm:$0xff]
    %v97 = vld [vmem:[#allocation6] sm:$0xff]
    %v98 = vld [vmem:[#allocation6 + $0x8] sm:$0xff]
    %v99 = vld [vmem:[#allocation6 + $0x10] sm:$0xff]
    %v100 = vld [vmem:[#allocation4] sm:$0xff]
    %v101 = vld [vmem:[%s3] sm:$0xff]
    %vm102 = vcmask 64512
    %v104 = vsel %vm102, %v100, 0
    %106 = vmatprep.subr.mxu0 0.0
    %107 = vmatpush1.msra.mxu0 %v101
    %108 = vmatprep.subr.mxu0 0.0
    %109 = vmatpush1.msra.mxu0 0.0
    %110 = vmatprep.subr.mxu0 0.0
    %111 = vmatpush1.msra.mxu0 0.0
    %112 = vmatprep.subr.mxu0 0.0
    %113 = vmatpush1.msra.mxu0 0.0
    %114 = vmatprep.subr.mxu0 0.0
    %115 = vmatpush1.msra.mxu0 0.0
    %116 = vmatprep.subr.mxu0 0.0
    %117 = vmatpush1.msra.mxu0 0.0
    %118 = vmatprep.subr.mxu0 0.0
    %119 = vmatpush1.msra.mxu0 0.0
    %120 = vmatprep.subr.mxu0 0.0
    %121 = vmatpush1.msra.mxu0 0.0
    %122 = vmatprep.subr.mxu0 0.0
    %123 = vmatpush1.msra.mxu0 0.0
    %124 = vmatprep.subr.mxu0 0.0
    %125 = vmatpush1.msra.mxu0 0.0
    %126 = vmatprep.subr.mxu0 0.0
    %127 = vmatpush1.msra.mxu0 0.0
    %128 = vmatprep.subr.mxu0 0.0
    %129 = vmatpush1.msra.mxu0 0.0
    %130 = vmatprep.subr.mxu0 0.0
    %131 = vmatpush1.msra.mxu0 0.0
    %132 = vmatprep.subr.mxu0 0.0
    %133 = vmatpush1.msra.mxu0 0.0
    %134 = vmatprep.subr.mxu0 0.0
    %135 = vmatpush1.msra.mxu0 0.0
    %136 = vmatprep.subr.mxu0 0.0
    %137 = vmatpush1.msra.mxu0 0.0
    %138 = vmatprep.subr.mxu0 0.0
    %139 = vmatpush1.msra.mxu0 0.0
    %140 = vmatprep.subr.mxu0 0.0
    %141 = vmatpush1.msra.mxu0 0.0
    %142 = vmatprep.subr.mxu0 0.0
    %143 = vmatpush1.msra.mxu0 0.0
    %144 = vmatprep.subr.mxu0 0.0
    %145 = vmatpush1.msra.mxu0 0.0
    %146 = vmatprep.subr.mxu0 0.0
    %147 = vmatpush1.msra.mxu0 0.0
    %148 = vmatprep.subr.mxu0 0.0
    %149 = vmatpush1.msra.mxu0 0.0
    %150 = vmatprep.subr.mxu0 0.0
    %151 = vmatpush1.msra.mxu0 0.0
    %152 = vmatprep.subr.mxu0 0.0
    %153 = vmatpush1.msra.mxu0 0.0
    %154 = vmatprep.subr.mxu0 0.0
    %155 = vmatpush1.msra.mxu0 0.0
    %156 = vmatprep.subr.mxu0 0.0
    %157 = vmatpush1.msra.mxu0 0.0
    %158 = vmatprep.subr.mxu0 0.0
    %159 = vmatpush1.msra.mxu0 0.0
    %160 = vmatprep.subr.mxu0 0.0
    %161 = vmatpush1.msra.mxu0 0.0
    %162 = vmatprep.subr.mxu0 0.0
    %163 = vmatpush1.msra.mxu0 0.0
    %164 = vmatprep.subr.mxu0 0.0
    %165 = vmatpush1.msra.mxu0 0.0
    %166 = vmatprep.subr.mxu0 0.0
    %167 = vmatpush1.msra.mxu0 0.0
    %168 = vmatprep.subr.mxu0 0.0
    %169 = vmatpush1.msra.mxu0 0.0
    %170 = vmatprep.mubr.f32.mxu0 0.0
    %171 = vmatmul.mubr.f32.gmra.mrb[0].mxu0 %v104
    %v172 = vpop.f32.mrb[0].mxu0
    %v173 = vadd.f32 0.0, %v172
    %v174 = vpop.f32.mrb[0].mxu0
    %175 = vdwg.mxu0
    %vm176 = vcmask 195584
    %v178 = vsel %vm176, %v96, 0
    %180 = vmatprep.subr.mxu0 0.0
    %181 = vmatpush1.msra.mxu0 %v97
    %182 = vmatprep.subr.mxu0 0.0
    %183 = vmatpush1.msra.mxu0 %v98
    %184 = vmatprep.subr.mxu0 0.0
    %185 = vmatpush1.msra.mxu0 %v99
    %186 = vmatprep.subr.mxu0 0.0
    %187 = vmatpush1.msra.mxu0 0.0
    %188 = vmatprep.subr.mxu0 0.0
    %189 = vmatpush1.msra.mxu0 0.0
    %190 = vmatprep.subr.mxu0 0.0
    %191 = vmatpush1.msra.mxu0 0.0
    %192 = vmatprep.subr.mxu0 0.0
    %193 = vmatpush1.msra.mxu0 0.0
    %194 = vmatprep.subr.mxu0 0.0
    %195 = vmatpush1.msra.mxu0 0.0
    %196 = vmatprep.subr.mxu0 0.0
    %197 = vmatpush1.msra.mxu0 0.0
    %198 = vmatprep.subr.mxu0 0.0
    %199 = vmatpush1.msra.mxu0 0.0
    %200 = vmatprep.subr.mxu0 0.0
    %201 = vmatpush1.msra.mxu0 0.0
    %202 = vmatprep.subr.mxu0 0.0
    %203 = vmatpush1.msra.mxu0 0.0
    %204 = vmatprep.subr.mxu0 0.0
    %205 = vmatpush1.msra.mxu0 0.0
    %206 = vmatprep.subr.mxu0 0.0
    %207 = vmatpush1.msra.mxu0 0.0
    %208 = vmatprep.subr.mxu0 0.0
    %209 = vmatpush1.msra.mxu0 0.0
    %210 = vmatprep.subr.mxu0 0.0
    %211 = vmatpush1.msra.mxu0 0.0
    %212 = vmatprep.subr.mxu0 0.0
    %213 = vmatpush1.msra.mxu0 0.0
    %214 = vmatprep.subr.mxu0 0.0
    %215 = vmatpush1.msra.mxu0 0.0
    %216 = vmatprep.subr.mxu0 0.0
    %217 = vmatpush1.msra.mxu0 0.0
    %218 = vmatprep.subr.mxu0 0.0
    %219 = vmatpush1.msra.mxu0 0.0
    %220 = vmatprep.subr.mxu0 0.0
    %221 = vmatpush1.msra.mxu0 0.0
    %222 = vmatprep.subr.mxu0 0.0
    %223 = vmatpush1.msra.mxu0 0.0
    %224 = vmatprep.subr.mxu0 0.0
    %225 = vmatpush1.msra.mxu0 0.0
    %226 = vmatprep.subr.mxu0 0.0
    %227 = vmatpush1.msra.mxu0 0.0
    %228 = vmatprep.subr.mxu0 0.0
    %229 = vmatpush1.msra.mxu0 0.0
    %230 = vmatprep.subr.mxu0 0.0
    %231 = vmatpush1.msra.mxu0 0.0
    %232 = vmatprep.subr.mxu0 0.0
    %233 = vmatpush1.msra.mxu0 0.0
    %234 = vmatprep.subr.mxu0 0.0
    %235 = vmatpush1.msra.mxu0 0.0
    %236 = vmatprep.subr.mxu0 0.0
    %237 = vmatpush1.msra.mxu0 0.0
    %238 = vmatprep.subr.mxu0 0.0
    %239 = vmatpush1.msra.mxu0 0.0
    %240 = vmatprep.subr.mxu0 0.0
    %241 = vmatpush1.msra.mxu0 0.0
    %242 = vmatprep.subr.mxu0 0.0
    %243 = vmatpush1.msra.mxu0 0.0
    %244 = vmatprep.mubr.f32.mxu0 0.0
    %245 = vmatmul.mubr.f32.gmra.mrb[0].mxu0 %v178
    %v246 = vpop.f32.mrb[0].mxu0
    %v247 = vadd.f32 %v173, %v246
    %v248 = vpop.f32.mrb[0].mxu0
    %249 = vdwg.mxu0
    %v250 = vld [vmem:[%s4] sm:$0x1]
    %v252 = vlaneseq
    %v253 = vshrl.u32 %v252, 7
    %v254 = vsub.s32 0, %v253
    %v255 = vrot.slane %v250, %v254
    %v257 = vadd.f32 %v247, %v255
    %v258 = vmax.f32 %v257, 0.0
    %v259 = vld [vmem:[#allocation7] sm:$0xff]
    %v260 = vld [vmem:[#allocation7 + $0x8] sm:$0xff]
    %v261 = vld [vmem:[#allocation7 + $0x10] sm:$0xff]
    %v262 = vld [vmem:[#allocation7 + $0x18] sm:$0xff]
    %v263 = vld [vmem:[%s6] sm:$0x1]
    %v265 = vlaneseq
    %v266 = vshrl.u32 %v265, 7
    %v267 = vsub.s32 0, %v266
    %v268 = vrot.slane %v263, %v267
    %vm270 = vcmask 261120
    %v272 = vsel %vm270, %v258, 0
    %274 = vmatprep.subr.mxu0 0.0
    %275 = vmatpush1.msra.mxu0 %v259
    %276 = vmatprep.subr.mxu0 0.0
    %277 = vmatpush1.msra.mxu0 %v260
    %278 = vmatprep.subr.mxu0 0.0
    %279 = vmatpush1.msra.mxu0 %v261
    %280 = vmatprep.subr.mxu0 0.0
    %281 = vmatpush1.msra.mxu0 %v262
    %282 = vmatprep.subr.mxu0 0.0
    %283 = vmatpush1.msra.mxu0 0.0
    %284 = vmatprep.subr.mxu0 0.0
    %285 = vmatpush1.msra.mxu0 0.0
    %286 = vmatprep.subr.mxu0 0.0
    %287 = vmatpush1.msra.mxu0 0.0
    %288 = vmatprep.subr.mxu0 0.0
    %289 = vmatpush1.msra.mxu0 0.0
    %290 = vmatprep.subr.mxu0 0.0
    %291 = vmatpush1.msra.mxu0 0.0
    %292 = vmatprep.subr.mxu0 0.0
    %293 = vmatpush1.msra.mxu0 0.0
    %294 = vmatprep.subr.mxu0 0.0
    %295 = vmatpush1.msra.mxu0 0.0
    %296 = vmatprep.subr.mxu0 0.0
    %297 = vmatpush1.msra.mxu0 0.0
    %298 = vmatprep.subr.mxu0 0.0
    %299 = vmatpush1.msra.mxu0 0.0
    %300 = vmatprep.subr.mxu0 0.0
    %301 = vmatpush1.msra.mxu0 0.0
    %302 = vmatprep.subr.mxu0 0.0
    %303 = vmatpush1.msra.mxu0 0.0
    %304 = vmatprep.subr.mxu0 0.0
    %305 = vmatpush1.msra.mxu0 0.0
    %306 = vmatprep.subr.mxu0 0.0
    %307 = vmatpush1.msra.mxu0 0.0
    %308 = vmatprep.subr.mxu0 0.0
    %309 = vmatpush1.msra.mxu0 0.0
    %310 = vmatprep.subr.mxu0 0.0
    %311 = vmatpush1.msra.mxu0 0.0
    %312 = vmatprep.subr.mxu0 0.0
    %313 = vmatpush1.msra.mxu0 0.0
    %314 = vmatprep.subr.mxu0 0.0
    %315 = vmatpush1.msra.mxu0 0.0
    %316 = vmatprep.subr.mxu0 0.0
    %317 = vmatpush1.msra.mxu0 0.0
    %318 = vmatprep.subr.mxu0 0.0
    %319 = vmatpush1.msra.mxu0 0.0
    %320 = vmatprep.subr.mxu0 0.0
    %321 = vmatpush1.msra.mxu0 0.0
    %322 = vmatprep.subr.mxu0 0.0
    %323 = vmatpush1.msra.mxu0 0.0
    %324 = vmatprep.subr.mxu0 0.0
    %325 = vmatpush1.msra.mxu0 0.0
    %326 = vmatprep.subr.mxu0 0.0
    %327 = vmatpush1.msra.mxu0 0.0
    %328 = vmatprep.subr.mxu0 0.0
    %329 = vmatpush1.msra.mxu0 0.0
    %330 = vmatprep.subr.mxu0 0.0
    %331 = vmatpush1.msra.mxu0 0.0
    %332 = vmatprep.subr.mxu0 0.0
    %333 = vmatpush1.msra.mxu0 0.0
    %334 = vmatprep.subr.mxu0 0.0
    %335 = vmatpush1.msra.mxu0 0.0
    %336 = vmatprep.subr.mxu0 0.0
    %337 = vmatpush1.msra.mxu0 0.0
    %338 = vmatprep.mubr.f32.mxu0 0.0
    %339 = vmatmul.mubr.f32.gmra.mrb[0].mxu0 %v272
    %v340 = vpop.f32.mrb[0].mxu0
    %v341 = vadd.f32 %v268, %v340
    %v342 = vpop.f32.mrb[0].mxu0
    %343 = vdwg.mxu0
    %v344 = vmax.f32 %v341, 0.0
    %v345 = vld [vmem:[#allocation9] sm:$0xff]
    %v346 = vld [vmem:[#allocation9 + $0x8] sm:$0xff]
    %v347 = vld [vmem:[#allocation9 + $0x10] sm:$0xff]
    %v348 = vld [vmem:[#allocation9 + $0x18] sm:$0xff]
    %v349 = vld [vmem:[%s8] sm:$0x1]
    %v351 = vlaneseq
    %v352 = vshrl.u32 %v351, 7
    %v353 = vsub.s32 0, %v352
    %v354 = vrot.slane %v349, %v353
    %v357 = vsel %vm270, %v344, 0
    %359 = vmatprep.subr.mxu0 0.0
    %360 = vmatpush1.msra.mxu0 %v345
    %361 = vmatprep.subr.mxu0 0.0
    %362 = vmatpush1.msra.mxu0 %v346
    %363 = vmatprep.subr.mxu0 0.0
    %364 = vmatpush1.msra.mxu0 %v347
    %365 = vmatprep.subr.mxu0 0.0
    %366 = vmatpush1.msra.mxu0 %v348
    %367 = vmatprep.subr.mxu0 0.0
    %368 = vmatpush1.msra.mxu0 0.0
    %369 = vmatprep.subr.mxu0 0.0
    %370 = vmatpush1.msra.mxu0 0.0
    %371 = vmatprep.subr.mxu0 0.0
    %372 = vmatpush1.msra.mxu0 0.0
    %373 = vmatprep.subr.mxu0 0.0
    %374 = vmatpush1.msra.mxu0 0.0
    %375 = vmatprep.subr.mxu0 0.0
    %376 = vmatpush1.msra.mxu0 0.0
    %377 = vmatprep.subr.mxu0 0.0
    %378 = vmatpush1.msra.mxu0 0.0
    %379 = vmatprep.subr.mxu0 0.0
    %380 = vmatpush1.msra.mxu0 0.0
    %381 = vmatprep.subr.mxu0 0.0
    %382 = vmatpush1.msra.mxu0 0.0
    %383 = vmatprep.subr.mxu0 0.0
    %384 = vmatpush1.msra.mxu0 0.0
    %385 = vmatprep.subr.mxu0 0.0
    %386 = vmatpush1.msra.mxu0 0.0
    %387 = vmatprep.subr.mxu0 0.0
    %388 = vmatpush1.msra.mxu0 0.0
    %389 = vmatprep.subr.mxu0 0.0
    %390 = vmatpush1.msra.mxu0 0.0
    %391 = vmatprep.subr.mxu0 0.0
    %392 = vmatpush1.msra.mxu0 0.0
    %393 = vmatprep.subr.mxu0 0.0
    %394 = vmatpush1.msra.mxu0 0.0
    %395 = vmatprep.subr.mxu0 0.0
    %396 = vmatpush1.msra.mxu0 0.0
    %397 = vmatprep.subr.mxu0 0.0
    %398 = vmatpush1.msra.mxu0 0.0
    %399 = vmatprep.subr.mxu0 0.0
    %400 = vmatpush1.msra.mxu0 0.0
    %401 = vmatprep.subr.mxu0 0.0
    %402 = vmatpush1.msra.mxu0 0.0
    %403 = vmatprep.subr.mxu0 0.0
    %404 = vmatpush1.msra.mxu0 0.0
    %405 = vmatprep.subr.mxu0 0.0
    %406 = vmatpush1.msra.mxu0 0.0
    %407 = vmatprep.subr.mxu0 0.0
    %408 = vmatpush1.msra.mxu0 0.0
    %409 = vmatprep.subr.mxu0 0.0
    %410 = vmatpush1.msra.mxu0 0.0
    %411 = vmatprep.subr.mxu0 0.0
    %412 = vmatpush1.msra.mxu0 0.0
    %413 = vmatprep.subr.mxu0 0.0
    %414 = vmatpush1.msra.mxu0 0.0
    %415 = vmatprep.subr.mxu0 0.0
    %416 = vmatpush1.msra.mxu0 0.0
    %417 = vmatprep.subr.mxu0 0.0
    %418 = vmatpush1.msra.mxu0 0.0
    %419 = vmatprep.subr.mxu0 0.0
    %420 = vmatpush1.msra.mxu0 0.0
    %421 = vmatprep.subr.mxu0 0.0
    %422 = vmatpush1.msra.mxu0 0.0
    %423 = vmatprep.mubr.f32.mxu0 0.0
    %424 = vmatmul.mubr.f32.gmra.mrb[0].mxu0 %v357
    %v425 = vpop.f32.mrb[0].mxu0
    %v426 = vadd.f32 %v354, %v425
    %v427 = vpop.f32.mrb[0].mxu0
    %428 = vdwg.mxu0
    %vm429 = vcmask 7168
    %430 = vst.msk [vmem:[%s9] sm:$0xff] %vm429, %v426
    // Predicated region
    $region58: #{tpu_custom_call.1} parent=1 // pred_check
      _
    $region59: #{tpu_custom_call.1} parent=1 // pred_check_branch
      %432 = sbr.rel (0) target = $region61
    $region60: #{tpu_custom_call.1} parent=1 // pred_region
      _
    $region61: #{tpu_custom_call.1} parent=1 // pred_fallthru
      _
    // Predicated region
    $region62: #{tpu_custom_call.1} parent=1 // pred_check
      _
    $region63: #{tpu_custom_call.1} parent=1 // pred_check_branch
      %434 = sbr.rel (0) target = $region65
    $region64: #{tpu_custom_call.1} parent=1 // pred_region
      _
    $region65: #{tpu_custom_call.1} parent=1 // pred_fallthru
      _
    %435 = vsyncpa [#allocation3], 1
    %436 = vsyncpa [#allocation5], 1
    %437 = vsyncpa [#allocation8], 1

</llo_original>
